<compile_context>
chip_gen: v5e
topology: v5e:2x2
jax: 0.10.0
libtpu: 0.0.40
codegen_flags: <defaults>
</compile_context>

<pallas_src>
import functools

import jax
import jax.numpy as jnp
from jax.experimental import pallas as pl
from jax.experimental.pallas import tpu as pltpu


def _i32(v):
    """Interpret a (possibly large) Python int as a signed int32 value."""
    v &= 0xFFFFFFFF
    return v - (1 << 32) if v >= (1 << 31) else v


_C_SEED = _i32(0x9E3779B9)
_C_MIX1 = _i32(0x7FEB352D)
_C_MIX2 = _i32(0x846CA68B)


def _pos_enc_kernel(seed_ref, x_ref, pe_ref, o_ref, *, p, training,
                    row_tile, col_tile, total_cols):
    # x_ref : (row_tile, col_tile) slab of the flattened (B, S*E) input.
    # pe_ref: (1, col_tile) slice of the flattened positional table (broadcast
    #         over the row/batch dimension).
    y = x_ref[...].astype(jnp.float32) + pe_ref[...].astype(jnp.float32)

    if training and p > 0.0:
        if p >= 1.0:
            # Degenerate nn.Dropout(p=1.0): everything dropped.
            y = jnp.zeros_like(y)
        else:
            # Counter-based hash RNG (stream differs from torch's; Bernoulli
            # keep-prob (1 - p) semantics match).  The per-tile constant lives
            # on the scalar unit; the vector path is 2 iotas + 3 int adds/muls
            # to form a unique per-element counter, then 2 xorshift-multiply
            # rounds.  NOTE: the counter is int32 and wraps if B*S*E nears
            # 2^31 (statistically benign stream aliasing).
            j = pl.program_id(0)                 # lane-tile index (outer axis)
            i = pl.program_id(1)                 # row-tile index (inner axis)
            base = (i * _i32(row_tile * total_cols) + j * _i32(col_tile)
                    + seed_ref[0] * _C_SEED)     # scalar-unit only
            h = (jax.lax.broadcasted_iota(jnp.int32, y.shape, 0)
                 * _i32(total_cols)
                 + jax.lax.broadcasted_iota(jnp.int32, y.shape, 1)
                 + base)
            # 2 xorshift-multiply rounds; (h >> k) & mask == logical shift.
            h = (h ^ ((h >> 16) & 0xFFFF)) * _C_MIX1
            h = (h ^ ((h >> 15) & 0x1FFFF)) * _C_MIX2
            r = (h >> 9) & 0x7FFFFF              # uniform in [0, 2^23)
            keep = r >= int(p * (1 << 23))       # P(keep) = 1 - p
            y = jnp.where(keep, y * (1.0 / (1.0 - p)), 0.0)

    o_ref[...] = y.astype(o_ref.dtype)


def _num_tensorcores():
    """Best-effort TensorCore count per chip (v7x has 2, v5e/v6e have 1)."""
    try:
        kind = jax.devices()[0].device_kind.lower()
    except Exception:
        return 1
    return 2 if ("v7" in kind or "tpu7" in kind) else 1


def _choose_tiles(rows, cols, itemsize, block_bytes, multi_block):
    """Pick (row_tile, col_tile) for a flattened (rows, cols) array.

    Constraints: col_tile == cols or col_tile % 128 == 0; row_tile == rows or
    row_tile % 8 == 0; row_tile * col_tile * itemsize <= block_bytes whenever
    the array does not fit in a single block.
    """
    budget = max(1, block_bytes // itemsize)
    # 1) Whole array fits in one block.
    if rows * cols <= budget:
        tb, tl = rows, cols
        if multi_block:
            # Guarantee >= 2 blocks so both v7x TensorCores get work; prefer a
            # lane split (keeps stores lane-dense / 128-aligned).
            if cols % 256 == 0:
                tl = cols // 2
            elif rows >= 16 and rows % 16 == 0:
                tb = rows // 2
        return tb, tl
    # 2) Full rows fit and at least 8 of them: tile only the batch (sublane)
    #    dimension, in multiples of 8.
    if cols <= budget and (budget // cols) >= 8:
        tb = min(rows, ((budget // cols) // 8) * 8)
        return tb, cols
    # 3) Tile the lane dimension too; keep the row tile at <= 8 so the block
    #    stays within budget (tl sized from budget // tb, not the full budget).
    tb = rows if rows < 8 else 8
    tl = max(128, ((budget // tb) // 128) * 128)
    tl = min(tl, cols)
    return tb, tl


def positional_encoding(x, pos_table, *, p=0.1, training=False, seed=0,
                        block_bytes=2 << 20, donate_x=False):
    """x: (B, S, E) float array; pos_table: (max_len, E). Returns (B, S, E)."""
    B, S, E = x.shape
    assert pos_table.shape[0] >= S, "seq_len exceeds max_len"
    assert 0.0 <= p <= 1.0, "dropout p must be in [0, 1]"

    L = S * E
    x2 = x.reshape(B, L)                                   # lane-dense layout
    pe2 = pos_table[:S].astype(x.dtype).reshape(1, L)      # embedding lookup == slice
    # NOTE: thread a fresh `seed` per training step to get a new dropout mask.
    seed_arr = jnp.array([seed], dtype=jnp.int32)

    itemsize = x.dtype.itemsize
    tb, tl = _choose_tiles(B, L, itemsize, block_bytes, _num_tensorcores() >= 2)
    # Lane-tile axis outermost so the pe slice stays resident across row tiles.
    grid = (pl.cdiv(L, tl), pl.cdiv(B, tb))

    # Real VMEM footprint: 2 buffers x (x block + out block) + 2 x pe block
    # (pe pads to 8 sublanes).  Give 25% + 2 MiB headroom, floor 8 MiB, cap at
    # v7x's 64 MiB physical VMEM.
    est = (4 * tb * tl + 2 * 8 * tl) * itemsize
    vmem_limit = int(min(64 << 20, max(est * 5 // 4 + (2 << 20), 8 << 20)))

    kernel = functools.partial(
        _pos_enc_kernel, p=float(p), training=bool(training),
        row_tile=tb, col_tile=tl, total_cols=L)

    out2 = pl.pallas_call(
        kernel,
        out_shape=jax.ShapeDtypeStruct((B, L), x.dtype),
        grid_spec=pltpu.PrefetchScalarGridSpec(
            num_scalar_prefetch=1,
            grid=grid,
            in_specs=[
                pl.BlockSpec((tb, tl), lambda j, i, seed: (i, j)),   # x slab
                pl.BlockSpec((1, tl), lambda j, i, seed: (0, j)),    # shared pos table
            ],
            out_specs=pl.BlockSpec((tb, tl), lambda j, i, seed: (i, j)),
        ),
        compiler_params=pltpu.CompilerParams(
            dimension_semantics=("parallel", "parallel"),
            vmem_limit_bytes=vmem_limit),
        # Operand list is (seed_arr, x2, pe2); index 1 is x2.
        input_output_aliases=({1: 0} if donate_x else {}),
    )(seed_arr, x2, pe2)
    return out2.reshape(B, S, E)


if __name__ == "__main__":
    # Module config: max_len=16, embedding_size=32, dropout p=0.1
    max_len, emb = 16, 32
    B, S = 2, 8
    p = 0.1

    key = jax.random.PRNGKey(0)
    kx, kw = jax.random.split(key)
    x = jax.random.normal(kx, (B, S, emb), dtype=jnp.float32)
    # nn.Embedding(max_len, embedding_size).weight ~ N(0,1), deterministic here.
    pos_weight = jax.random.normal(kw, (max_len, emb), dtype=jnp.float32)

    ref = x + pos_weight[:S][None, :, :]

    # ---- eval mode (dropout is identity) ----
    out_eval = jax.block_until_ready(
        positional_encoding(x, pos_weight, p=p, training=False)
    )
    assert out_eval.shape == (B, S, emb)
    assert jnp.allclose(out_eval, ref, atol=1e-6), "eval-mode mismatch"

    # ---- train mode (in-kernel dropout: elements are 0 or ref/(1-p)) ----
    out_train = jax.block_until_ready(
        positional_encoding(x, pos_weight, p=p, training=True, seed=123)
    )
    scaled = ref * (1.0 / (1.0 - p))
    ok = jnp.where(out_train == 0.0, True, jnp.isclose(out_train, scaled, atol=1e-5))
    assert bool(jnp.all(ok)), "train-mode dropout structure mismatch"
    drop_frac = float(jnp.mean(out_train == 0.0))
    assert 0.0 < drop_frac < 0.4, f"implausible dropout fraction {drop_frac}"

    print("KERNEL_OK")
</pallas_src>

<mosaic_0001>
module attributes {stable_mosaic.version = 11 : i64} {
  func.func @_pos_enc_kernel(%arg0: i32, %arg1: i32, %arg2: memref<1xi32, #tpu.memory_space<smem>>, %arg3: memref<2x256xf32, #tpu.memory_space<vmem>>, %arg4: memref<1x256xf32, #tpu.memory_space<vmem>>, %arg5: memref<2x256xf32, #tpu.memory_space<vmem>>) attributes {dimension_semantics = [#tpu.dimension_semantics<parallel>, #tpu.dimension_semantics<parallel>], iteration_bounds = array<i64: 1, 1>, scalar_prefetch = 1 : i64, scratch_operands = 0 : i64, tpu.core_type = #tpu.core_type<tc>, window_params = [{transform_indices = @transform_0, window_bounds = array<i64: 2, 256>}, {transform_indices = @transform_1, window_bounds = array<i64: 1, 256>}, {transform_indices = @transform_2, window_bounds = array<i64: 2, 256>}]} {
    %c0 = arith.constant 0 : index
    %c0_0 = arith.constant 0 : index
    %0 = vector.load %arg3[%c0, %c0_0] : memref<2x256xf32, #tpu.memory_space<vmem>>, vector<2x256xf32>
    %c0_1 = arith.constant 0 : index
    %c0_2 = arith.constant 0 : index
    %1 = vector.load %arg4[%c0_1, %c0_2] : memref<1x256xf32, #tpu.memory_space<vmem>>, vector<1x256xf32>
    %2 = vector.broadcast %1 : vector<1x256xf32> to vector<2x256xf32>
    %3 = arith.addf %0, %2 : vector<2x256xf32>
    %c0_3 = arith.constant 0 : index
    %c0_4 = arith.constant 0 : index
    %4 = vector.load %arg5[%c0_3, %c0_4] : memref<2x256xf32, #tpu.memory_space<vmem>>, vector<2x256xf32>
    tpu.vector_store %arg5[%c0_3, %c0_4], %3 {strides = array<i32>} : memref<2x256xf32, #tpu.memory_space<vmem>>, vector<2x256xf32>,
    return
  }
  func.func @transform_0(%arg0: i32, %arg1: i32, %arg2: memref<1xi32, #tpu.memory_space<smem>>) -> (i32, i32) {
    %c0_i32 = arith.constant 0 : i32
    return %arg1, %arg0 : i32, i32
  }
  func.func @transform_1(%arg0: i32, %arg1: i32, %arg2: memref<1xi32, #tpu.memory_space<smem>>) -> (i32, i32) {
    %c0_i32 = arith.constant 0 : i32
    %c0_i32_0 = arith.constant 0 : i32
    return %c0_i32, %arg0 : i32, i32
  }
  func.func @transform_2(%arg0: i32, %arg1: i32, %arg2: memref<1xi32, #tpu.memory_space<smem>>) -> (i32, i32) {
    %c0_i32 = arith.constant 0 : i32
    return %arg1, %arg0 : i32, i32
  }
}

</mosaic_0001>

<llo_original>
// kernel: tpu_custom_call.1
$region0: #{tpu_custom_call.1}
  #allocation0 [shape = 'u32[]', space=smem, size = 0x4, offset = 0x4, fixed_abs, tag = 'smem constant byte address 0x4 - core index']
  #allocation1 [shape = 'u32[72,128]{1,0:T(1,128)}', space=vmem, size = 0x9000, scoped, tag = 'internal scratch']
  #allocation2 [shape = 's32[1]{0}', space=sflag, size = 0x4, scoped, tag = 'scoped memory for tpu_custom_call.1']
  #allocation3 [shape = 's32[1]{0:T(128)S(6)}', space=smem, size = 0x200, scoped, tag = 'prefetched SMEM operand 0']
  %s0 = inlined_call_operand.<no memory space> [shape: s32[1], index: 0, kind: input, shape index: {}]
  %s1 = inlined_call_operand.hbm [shape: f32[2,256], index: 1, kind: input, shape index: {}]
  %s2 = inlined_call_operand.vmem [shape: f32[1,256], index: 2, kind: input, shape index: {}]
  %s3 = inlined_call_operand.hbm [shape: f32[2,256], index: 3, kind: output, shape index: {}]
  %s4 = sld [smem:[#allocation0]]
  $region22: #{tpu_custom_call.1} parent=0
    _
  %s6 = ssub.s32 1, %s4
  %s7 = scalar_select 0, %s6, %s4
  %8 = sst [smem:[#allocation3]] %s0
  $region1: #{tpu_custom_call.1} parent=0
    #allocation4 [shape = 'u8[2048]{0}', space=vmem, size = 0x800, scoped, tag = 'input window, operand 1, single buffered']
    #allocation5 [shape = 's32[1]{0}', space=sflag, size = 0x4, scoped, tag = 'scoped memory for tpu_custom_call.1']
    #allocation6 [shape = 's32[1]{0}', space=sflag, size = 0x4, scoped, tag = 'scoped memory for tpu_custom_call.1']
    #allocation7 [shape = 'u8[2048]{0}', space=vmem, size = 0x800, scoped, tag = 'output window, operand 0, single buffered']
    %9 = vsyncpa [#allocation5], 0
    %10 = vsyncpa [#allocation6], 0
    // Predicated region
    $region2: #{tpu_custom_call.1} parent=1 // pred_check
      _
    $region3: #{tpu_custom_call.1} parent=1 // pred_check_branch
      %12 = sbr.rel (0) target = $region5
    $region4: #{tpu_custom_call.1} parent=1 // pred_region
      %14 = vsyncadd [#allocation5], 0
      %s16 = sshll.u32 %s1, 4
      %s17 = int_to_ptr.hbm [resolvable:$true] %s16
      %s18 = sshll.u32 [#allocation4], 4
      %s19 = int_to_ptr.vmem [resolvable:$true] %s18
      %21 = dma.hbm_to_vmem [thread:$0]  %s17, 64, %s19, [#allocation5]
    $region5: #{tpu_custom_call.1} parent=1 // pred_fallthru
      _
    // Predicated region
    $region6: #{tpu_custom_call.1} parent=1 // pred_check
      _
    $region7: #{tpu_custom_call.1} parent=1 // pred_check_branch
      %23 = sbr.rel (0) target = $region9
    $region8: #{tpu_custom_call.1} parent=1 // pred_region
      _
    $region9: #{tpu_custom_call.1} parent=1 // pred_fallthru
      _
    // Predicated region
    $region10: #{tpu_custom_call.1} parent=1 // pred_check
      _
    $region11: #{tpu_custom_call.1} parent=1 // pred_check_branch
      %25 = sbr.rel (0) target = $region13
    $region12: #{tpu_custom_call.1} parent=1 // pred_region
      %27 = dma.done [#allocation5], 64
    $region13: #{tpu_custom_call.1} parent=1 // pred_fallthru
      _
    %v28 = vld [vmem:[#allocation4] sm:$0xf]
    %v29 = vld [vmem:[%s2] sm:$0x3]
    %v31 = vperm.slane %v29, 0
    %v32 = vperm.slane %v29, 1
    %v33 = vrot.slane %v32, 6
    %vm34 = vcmask 1041408
    %v35 = vsel %vm34, %v31, %v33
    %v37 = vadd.f32 %v28, %v35
    %38 = vst [vmem:[#allocation7] sm:$0xf] %v37
    // Predicated region
    $region14: #{tpu_custom_call.1} parent=1 // pred_check
      _
    $region15: #{tpu_custom_call.1} parent=1 // pred_check_branch
      %40 = sbr.rel (0) target = $region17
    $region16: #{tpu_custom_call.1} parent=1 // pred_region
      %42 = vsyncadd [#allocation6], 0
      %s44 = sshll.u32 [#allocation7], 4
      %s45 = int_to_ptr.vmem [resolvable:$true] %s44
      %s46 = sshll.u32 %s3, 4
      %s47 = int_to_ptr.hbm [resolvable:$true] %s46
      %49 = dma.vmem_to_hbm [thread:$0]  %s45, 64, %s47, [#allocation6]
    $region17: #{tpu_custom_call.1} parent=1 // pred_fallthru
      _
    // Predicated region
    $region18: #{tpu_custom_call.1} parent=1 // pred_check
      _
    $region19: #{tpu_custom_call.1} parent=1 // pred_check_branch
      %51 = sbr.rel (0) target = $region21
    $region20: #{tpu_custom_call.1} parent=1 // pred_region
      %53 = dma.done [#allocation6], 64
    $region21: #{tpu_custom_call.1} parent=1 // pred_fallthru
      _
    %54 = vsyncpa [#allocation5], 1
    %55 = vsyncpa [#allocation6], 1

</llo_original>
